<compile_context>
chip_gen: v6e
topology: v6e:2x2x1
jax: 0.10.0
libtpu: 0.0.40
codegen_flags: <defaults>
</compile_context>

<pallas_src>
import functools

import jax
import jax.numpy as jnp
from jax.experimental import pallas as pl
from jax.experimental.pallas import tpu as pltpu


LANE = 128


def _round_up(x, m):
    return (x + m - 1) // m * m


def _qvectnet_kernel(x_ref, w1_ref, b1_ref, w2_ref, b2_ref, w3_ref, b3_ref, o_ref):
    """Fused MLP: relu(x@W1+b1) -> relu(.@W2+b2) -> .@W3+b3.

    MXU sees bf16 operands with f32 accumulation; all elementwise work (bias add,
    ReLU) is done on the f32 accumulator. Only the first n_actions output columns
    are stored (narrow output block -> minimal HBM writeback).
    """
    x = x_ref[...].astype(jnp.bfloat16)

    # fc1 + ReLU
    h1 = jnp.dot(x, w1_ref[...], preferred_element_type=jnp.float32) + b1_ref[...]
    h1 = jnp.maximum(h1, 0.0)

    # fc2 + ReLU
    h2 = jnp.dot(h1.astype(jnp.bfloat16), w2_ref[...],
                 preferred_element_type=jnp.float32) + b2_ref[...]
    h2 = jnp.maximum(h2, 0.0)

    # out (no activation); W3/b3 are lane-padded to 128 cols for the MXU, but we
    # only store the true n_actions columns.
    out = jnp.dot(h2.astype(jnp.bfloat16), w3_ref[...],
                  preferred_element_type=jnp.float32) + b3_ref[...]

    n_actions = o_ref.shape[-1]
    o_ref[...] = out[:, :n_actions].astype(o_ref.dtype)


@functools.partial(jax.jit, static_argnames=("n_actions", "block_b"))
def qvectnet_forward(x, w1, b1, w2, b2, w3, b3, *, n_actions, block_b=1024):
    """x: (B, D_in) f32 (or bf16).  Weights are pre-transposed (in, out) bf16;
    biases (1, out) f32.  W3/b3 are pre-padded to 128 output lanes; the kernel
    writes only the first n_actions columns."""
    B, d_in = x.shape

    # Validate / normalize the row block (sublane granularity is 8).
    block_b = max(8, _round_up(int(block_b), 8))

    # Number of batch blocks: amortize per-step overhead with big blocks, but
    # keep >= 2 blocks for large batches so v7x's 2 TensorCores both get work.
    num_blocks = pl.cdiv(B, block_b)
    if B >= 512 and num_blocks < 2:
        num_blocks = 2

    # Row block sized so batch padding is bounded (< 8 rows per block).
    bb = _round_up(pl.cdiv(B, num_blocks), 8)
    B_pad = bb * num_blocks
    if B_pad != B:
        x = jnp.pad(x, ((0, B_pad - B), (0, 0)))

    out = pl.pallas_call(
        _qvectnet_kernel,
        out_shape=jax.ShapeDtypeStruct((B_pad, n_actions), jnp.float32),
        grid=(num_blocks,),
        in_specs=[
            # activations: tiled over the batch grid
            pl.BlockSpec((bb, d_in), lambda i: (i, 0)),
            # weights/biases: constant block index -> resident in VMEM across steps
            pl.BlockSpec(w1.shape, lambda i: (0, 0)),
            pl.BlockSpec(b1.shape, lambda i: (0, 0)),
            pl.BlockSpec(w2.shape, lambda i: (0, 0)),
            pl.BlockSpec(b2.shape, lambda i: (0, 0)),
            pl.BlockSpec(w3.shape, lambda i: (0, 0)),
            pl.BlockSpec(b3.shape, lambda i: (0, 0)),
        ],
        # Narrow output block: last dim == full array dim (n_actions), so the
        # (8,128) constraint does not apply; writeback is only n_actions cols.
        out_specs=pl.BlockSpec((bb, n_actions), lambda i: (i, 0)),
        compiler_params=pltpu.CompilerParams(
            dimension_semantics=("parallel",),  # shards across v7x's 2 TensorCores
            vmem_limit_bytes=24 << 20,
        ),
    )(x, w1, b1, w2, b2, w3, b3)

    if B_pad != B:
        out = out[:B]
    return out


def init_params(key, input_dim, fc1_dims, fc2_dims, n_actions):
    """nn.Linear default init U(-1/sqrt(fan_in), +1/sqrt(fan_in)).
    Weights returned transposed to (in, out) in bf16; biases (1, out) in f32.
    The output layer is zero-padded from n_actions to 128 lanes (for the MXU)."""
    ks = jax.random.split(key, 6)

    def linear(kw, kb, fan_in, fan_out, pad_out=None):
        bound = 1.0 / jnp.sqrt(jnp.float32(fan_in))
        w = jax.random.uniform(kw, (fan_in, fan_out), jnp.float32, -bound, bound)
        b = jax.random.uniform(kb, (1, fan_out), jnp.float32, -bound, bound)
        if pad_out is not None and pad_out > fan_out:
            w = jnp.pad(w, ((0, 0), (0, pad_out - fan_out)))
            b = jnp.pad(b, ((0, 0), (0, pad_out - fan_out)))
        return w.astype(jnp.bfloat16), b  # weights bf16 for the MXU, biases f32

    n_pad = _round_up(n_actions, LANE)
    w1, b1 = linear(ks[0], ks[1], input_dim, fc1_dims)
    w2, b2 = linear(ks[2], ks[3], fc1_dims, fc2_dims)
    w3, b3 = linear(ks[4], ks[5], fc2_dims, n_actions, pad_out=n_pad)
    return w1, b1, w2, b2, w3, b3


def reference_forward(x, w1, b1, w2, b2, w3, b3, n_actions):
    """Pure-JAX reference with the same bf16-operand / f32-accumulate arithmetic.
    NOTE: bf16 operands diverge from an f32 PyTorch QVectNet by ~1e-2 relative."""
    bf16 = jnp.bfloat16
    h1 = jnp.maximum(
        jnp.dot(x.astype(bf16), w1, preferred_element_type=jnp.float32) + b1, 0.0)
    h2 = jnp.maximum(
        jnp.dot(h1.astype(bf16), w2, preferred_element_type=jnp.float32) + b2, 0.0)
    out = jnp.dot(h2.astype(bf16), w3, preferred_element_type=jnp.float32) + b3
    return out[:, :n_actions]


if __name__ == "__main__":
    # Small shapes consistent with the module: vector observations, 256-wide MLP.
    B = 8               # batch
    input_dims = (32,)  # input_dims[0]
    fc1_dims = 256
    fc2_dims = 256
    n_actions = 4

    key = jax.random.PRNGKey(0)
    k_params, k_x = jax.random.split(key)

    params = init_params(k_params, input_dims[0], fc1_dims, fc2_dims, n_actions)
    x = jax.random.normal(k_x, (B, input_dims[0]), jnp.float32)

    out = qvectnet_forward(x, *params, n_actions=n_actions)
    out = jax.block_until_ready(out)

    ref = reference_forward(x, *params, n_actions)
    assert out.shape == (B, n_actions), out.shape
    assert jnp.allclose(out, ref, atol=2e-2, rtol=2e-2), "mismatch vs reference"

    print("KERNEL_OK")
</pallas_src>

<mosaic_0001>
module attributes {stable_mosaic.version = 11 : i64} {
  func.func @_qvectnet_kernel(%arg0: i32, %arg1: memref<8x32xf32, #tpu.memory_space<vmem>>, %arg2: memref<32x256xbf16, #tpu.memory_space<vmem>>, %arg3: memref<1x256xf32, #tpu.memory_space<vmem>>, %arg4: memref<256x256xbf16, #tpu.memory_space<vmem>>, %arg5: memref<1x256xf32, #tpu.memory_space<vmem>>, %arg6: memref<256x128xbf16, #tpu.memory_space<vmem>>, %arg7: memref<1x128xf32, #tpu.memory_space<vmem>>, %arg8: memref<8x4xf32, #tpu.memory_space<vmem>>) attributes {dimension_semantics = [#tpu.dimension_semantics<parallel>], iteration_bounds = array<i64: 1>, scalar_prefetch = 0 : i64, scratch_operands = 0 : i64, tpu.core_type = #tpu.core_type<tc>, window_params = [{transform_indices = @transform_0, window_bounds = array<i64: 8, 32>}, {pipeline_mode = #tpu.pipeline_mode<synchronous>, transform_indices = @transform_1, window_bounds = array<i64: 32, 256>}, {pipeline_mode = #tpu.pipeline_mode<synchronous>, transform_indices = @transform_2, window_bounds = array<i64: 1, 256>}, {pipeline_mode = #tpu.pipeline_mode<synchronous>, transform_indices = @transform_3, window_bounds = array<i64: 256, 256>}, {pipeline_mode = #tpu.pipeline_mode<synchronous>, transform_indices = @transform_4, window_bounds = array<i64: 1, 256>}, {pipeline_mode = #tpu.pipeline_mode<synchronous>, transform_indices = @transform_5, window_bounds = array<i64: 256, 128>}, {pipeline_mode = #tpu.pipeline_mode<synchronous>, transform_indices = @transform_6, window_bounds = array<i64: 1, 128>}, {transform_indices = @transform_7, window_bounds = array<i64: 8, 4>}]} {
    %c0 = arith.constant 0 : index
    %c0_0 = arith.constant 0 : index
    %0 = vector.load %arg1[%c0, %c0_0] : memref<8x32xf32, #tpu.memory_space<vmem>>, vector<8x32xf32>
    %1 = arith.truncf %0 : vector<8x32xf32> to vector<8x32xbf16>
    %c0_1 = arith.constant 0 : index
    %c0_2 = arith.constant 0 : index
    %2 = vector.load %arg2[%c0_1, %c0_2] : memref<32x256xbf16, #tpu.memory_space<vmem>>, vector<32x256xbf16>
    %cst = arith.constant dense<0.000000e+00> : vector<8x256xf32>
    %3 = tpu.matmul %1, %2, %cst {dimension_numbers = #tpu.dot_dimension_numbers<[1], [0], [0], [1], [0, 0, 1, 1], [], []>} : vector<8x32xbf16>, vector<32x256xbf16>, vector<8x256xf32> -> vector<8x256xf32>
    %c0_3 = arith.constant 0 : index
    %c0_4 = arith.constant 0 : index
    %4 = vector.load %arg3[%c0_3, %c0_4] : memref<1x256xf32, #tpu.memory_space<vmem>>, vector<1x256xf32>
    %5 = vector.broadcast %4 : vector<1x256xf32> to vector<8x256xf32>
    %6 = arith.addf %3, %5 : vector<8x256xf32>
    %cst_5 = arith.constant 0.000000e+00 : f32
    %7 = vector.broadcast %cst_5 : f32 to vector<8x256xf32>
    %8 = arith.maximumf %6, %7 : vector<8x256xf32>
    %9 = arith.truncf %8 : vector<8x256xf32> to vector<8x256xbf16>
    %c0_6 = arith.constant 0 : index
    %c0_7 = arith.constant 0 : index
    %10 = vector.load %arg4[%c0_6, %c0_7] : memref<256x256xbf16, #tpu.memory_space<vmem>>, vector<256x256xbf16>
    %cst_8 = arith.constant dense<0.000000e+00> : vector<8x256xf32>
    %11 = tpu.matmul %9, %10, %cst_8 {dimension_numbers = #tpu.dot_dimension_numbers<[1], [0], [0], [1], [0, 0, 1, 1], [], []>} : vector<8x256xbf16>, vector<256x256xbf16>, vector<8x256xf32> -> vector<8x256xf32>
    %c0_9 = arith.constant 0 : index
    %c0_10 = arith.constant 0 : index
    %12 = vector.load %arg5[%c0_9, %c0_10] : memref<1x256xf32, #tpu.memory_space<vmem>>, vector<1x256xf32>
    %13 = vector.broadcast %12 : vector<1x256xf32> to vector<8x256xf32>
    %14 = arith.addf %11, %13 : vector<8x256xf32>
    %cst_11 = arith.constant 0.000000e+00 : f32
    %15 = vector.broadcast %cst_11 : f32 to vector<8x256xf32>
    %16 = arith.maximumf %14, %15 : vector<8x256xf32>
    %17 = arith.truncf %16 : vector<8x256xf32> to vector<8x256xbf16>
    %c0_12 = arith.constant 0 : index
    %c0_13 = arith.constant 0 : index
    %18 = vector.load %arg6[%c0_12, %c0_13] : memref<256x128xbf16, #tpu.memory_space<vmem>>, vector<256x128xbf16>
    %cst_14 = arith.constant dense<0.000000e+00> : vector<8x128xf32>
    %19 = tpu.matmul %17, %18, %cst_14 {dimension_numbers = #tpu.dot_dimension_numbers<[1], [0], [0], [1], [0, 0, 1, 1], [], []>} : vector<8x256xbf16>, vector<256x128xbf16>, vector<8x128xf32> -> vector<8x128xf32>
    %c0_15 = arith.constant 0 : index
    %c0_16 = arith.constant 0 : index
    %20 = vector.load %arg7[%c0_15, %c0_16] : memref<1x128xf32, #tpu.memory_space<vmem>>, vector<1x128xf32>
    %21 = vector.broadcast %20 : vector<1x128xf32> to vector<8x128xf32>
    %22 = arith.addf %19, %21 : vector<8x128xf32>
    %23 = vector.extract_strided_slice %22 {offsets = [0, 0], sizes = [8, 4], strides = [1, 1]} : vector<8x128xf32> to vector<8x4xf32>
    %c0_17 = arith.constant 0 : index
    %c0_18 = arith.constant 0 : index
    %24 = vector.load %arg8[%c0_17, %c0_18] : memref<8x4xf32, #tpu.memory_space<vmem>>, vector<8x4xf32>
    tpu.vector_store %arg8[%c0_17, %c0_18], %23 {strides = array<i32>} : memref<8x4xf32, #tpu.memory_space<vmem>>, vector<8x4xf32>,
    return
  }
  func.func @transform_0(%arg0: i32) -> (i32, i32) {
    %c0_i32 = arith.constant 0 : i32
    %c0_i32_0 = arith.constant 0 : i32
    return %arg0, %c0_i32 : i32, i32
  }
  func.func @transform_1(%arg0: i32) -> (i32, i32) {
    %c0_i32 = arith.constant 0 : i32
    %c0_i32_0 = arith.constant 0 : i32
    %c0_i32_1 = arith.constant 0 : i32
    return %c0_i32, %c0_i32_0 : i32, i32
  }
  func.func @transform_2(%arg0: i32) -> (i32, i32) {
    %c0_i32 = arith.constant 0 : i32
    %c0_i32_0 = arith.constant 0 : i32
    %c0_i32_1 = arith.constant 0 : i32
    return %c0_i32, %c0_i32_0 : i32, i32
  }
  func.func @transform_3(%arg0: i32) -> (i32, i32) {
    %c0_i32 = arith.constant 0 : i32
    %c0_i32_0 = arith.constant 0 : i32
    %c0_i32_1 = arith.constant 0 : i32
    return %c0_i32, %c0_i32_0 : i32, i32
  }
  func.func @transform_4(%arg0: i32) -> (i32, i32) {
    %c0_i32 = arith.constant 0 : i32
    %c0_i32_0 = arith.constant 0 : i32
    %c0_i32_1 = arith.constant 0 : i32
    return %c0_i32, %c0_i32_0 : i32, i32
  }
  func.func @transform_5(%arg0: i32) -> (i32, i32) {
    %c0_i32 = arith.constant 0 : i32
    %c0_i32_0 = arith.constant 0 : i32
    %c0_i32_1 = arith.constant 0 : i32
    return %c0_i32, %c0_i32_0 : i32, i32
  }
  func.func @transform_6(%arg0: i32) -> (i32, i32) {
    %c0_i32 = arith.constant 0 : i32
    %c0_i32_0 = arith.constant 0 : i32
    %c0_i32_1 = arith.constant 0 : i32
    return %c0_i32, %c0_i32_0 : i32, i32
  }
  func.func @transform_7(%arg0: i32) -> (i32, i32) {
    %c0_i32 = arith.constant 0 : i32
    %c0_i32_0 = arith.constant 0 : i32
    return %arg0, %c0_i32 : i32, i32
  }
}

</mosaic_0001>

<llo_original>
// kernel: qvectnet_forward.1
$region0: #{qvectnet_forward.1}
  #allocation0 [shape = 'u32[]', space=smem, size = 0x4, offset = 0x4, fixed_abs, tag = 'smem constant byte address 0x4 - core index']
  #allocation1 [shape = 'u32[144,128]{1,0:T(1,128)}', space=vmem, size = 0x12000, scoped, tag = 'internal scratch']
  %s0 = inlined_call_operand.hbm [shape: f32[8,32], index: 0, kind: input, shape index: {}]
  %s1 = inlined_call_operand.hbm [shape: bf16[32,256], index: 1, kind: input, shape index: {}]
  %s2 = inlined_call_operand.vmem [shape: f32[1,256], index: 2, kind: input, shape index: {}]
  %s3 = inlined_call_operand.hbm [shape: bf16[256,256], index: 3, kind: input, shape index: {}]
  %s4 = inlined_call_operand.vmem [shape: f32[1,256], index: 4, kind: input, shape index: {}]
  %s5 = inlined_call_operand.hbm [shape: bf16[256,128], index: 5, kind: input, shape index: {}]
  %s6 = inlined_call_operand.vmem [shape: f32[1,128], index: 6, kind: input, shape index: {}]
  %s7 = inlined_call_operand.vmem [shape: f32[8,4], index: 7, kind: output, shape index: {}]
  %s8 = sld [smem:[#allocation0]]
  $region54: #{qvectnet_forward.1} parent=0
    _
  %s10 = ssub.s32 1, %s8
  %s11 = scalar_select 0, %s10, %s8
  $region1: #{qvectnet_forward.1} parent=0
    #allocation2 [shape = 'u8[4096]{0}', space=vmem, size = 0x1000, scoped, tag = 'input window, operand 0, single buffered']
    #allocation3 [shape = 's32[1]{0}', space=sflag, size = 0x4, scoped, tag = 'scoped memory for qvectnet_forward.1']
    #allocation4 [shape = 'u8[16384]{0}', space=vmem, size = 0x4000, scoped, tag = 'input window, operand 1, single buffered']
    #allocation5 [shape = 's32[1]{0}', space=sflag, size = 0x4, scoped, tag = 'scoped memory for qvectnet_forward.1']
    #allocation6 [shape = 'u8[131072]{0}', space=vmem, size = 0x20000, scoped, tag = 'input window, operand 3, single buffered']
    #allocation7 [shape = 'u8[65536]{0}', space=vmem, size = 0x10000, scoped, tag = 'input window, operand 5, single buffered']
    #allocation8 [shape = 's32[1]{0}', space=sflag, size = 0x4, scoped, tag = 'scoped memory for qvectnet_forward.1']
    %12 = vsyncpa [#allocation3], 0
    %13 = vsyncpa [#allocation5], 0
    %14 = vsyncpa [#allocation8], 0
    // Predicated region
    $region2: #{qvectnet_forward.1} parent=1 // pred_check
      _
    $region3: #{qvectnet_forward.1} parent=1 // pred_check_branch
      %16 = sbr.rel (0) target = $region5
    $region4: #{qvectnet_forward.1} parent=1 // pred_region
      %s18 = ssub.s32 128, 128
      %19 = vsyncadd [#allocation3], %s18
      %s21 = sshll.u32 [#allocation2], 4
      %s22 = int_to_ptr.vmem [resolvable:$true] %s21
      %24 = dma.hbm_to_vmem [thread:$0]  %s0, 128, %s22, [#allocation3]
    $region5: #{qvectnet_forward.1} parent=1 // pred_fallthru
      _
    // Predicated region
    $region6: #{qvectnet_forward.1} parent=1 // pred_check
      _
    $region7: #{qvectnet_forward.1} parent=1 // pred_check_branch
      %26 = sbr.rel (0) target = $region9
    $region8: #{qvectnet_forward.1} parent=1 // pred_region
      %s28 = ssub.s32 512, 512
      %29 = vsyncadd [#allocation5], %s28
      %s30 = sshll.u32 [#allocation4], 4
      %s31 = int_to_ptr.vmem [resolvable:$true] %s30
      %36 = dma.hbm_to_vmem [thread:$0]  %s1, 512, %s31, [#allocation5], 128, 128, 8
    $region9: #{qvectnet_forward.1} parent=1 // pred_fallthru
      _
    // Predicated region
    $region10: #{qvectnet_forward.1} parent=1 // pred_check
      _
    $region11: #{qvectnet_forward.1} parent=1 // pred_check_branch
      %38 = sbr.rel (0) target = $region13
    $region12: #{qvectnet_forward.1} parent=1 // pred_region
      _
    $region13: #{qvectnet_forward.1} parent=1 // pred_fallthru
      _
    // Predicated region
    $region14: #{qvectnet_forward.1} parent=1 // pred_check
      _
    $region15: #{qvectnet_forward.1} parent=1 // pred_check_branch
      %40 = sbr.rel (0) target = $region17
    $region16: #{qvectnet_forward.1} parent=1 // pred_region
      %s42 = ssub.s32 4096, 4096
      %43 = vsyncadd [#allocation5], %s42
      %s44 = sshll.u32 [#allocation6], 4
      %s45 = int_to_ptr.vmem [resolvable:$true] %s44
      %50 = dma.hbm_to_vmem [thread:$0]  %s3, 4096, %s45, [#allocation5], 128, 128, 8
    $region17: #{qvectnet_forward.1} parent=1 // pred_fallthru
      _
    // Predicated region
    $region18: #{qvectnet_forward.1} parent=1 // pred_check
      _
    $region19: #{qvectnet_forward.1} parent=1 // pred_check_branch
      %52 = sbr.rel (0) target = $region21
    $region20: #{qvectnet_forward.1} parent=1 // pred_region
      _
    $region21: #{qvectnet_forward.1} parent=1 // pred_fallthru
      _
    // Predicated region
    $region22: #{qvectnet_forward.1} parent=1 // pred_check
      _
    $region23: #{qvectnet_forward.1} parent=1 // pred_check_branch
      %54 = sbr.rel (0) target = $region25
    $region24: #{qvectnet_forward.1} parent=1 // pred_region
      %s56 = ssub.s32 2048, 2048
      %57 = vsyncadd [#allocation8], %s56
      %s58 = sshll.u32 [#allocation7], 4
      %s59 = int_to_ptr.vmem [resolvable:$true] %s58
      %64 = dma.hbm_to_vmem [thread:$0]  %s5, 2048, %s59, [#allocation8], 64, 64, 4
    $region25: #{qvectnet_forward.1} parent=1 // pred_fallthru
      _
    // Predicated region
    $region26: #{qvectnet_forward.1} parent=1 // pred_check
      _
    $region27: #{qvectnet_forward.1} parent=1 // pred_check_branch
      %66 = sbr.rel (0) target = $region29
    $region28: #{qvectnet_forward.1} parent=1 // pred_region
      _
    $region29: #{qvectnet_forward.1} parent=1 // pred_fallthru
      _
    // Predicated region
    $region30: #{qvectnet_forward.1} parent=1 // pred_check
      _
    $region31: #{qvectnet_forward.1} parent=1 // pred_check_branch
      %68 = sbr.rel (0) target = $region33
    $region32: #{qvectnet_forward.1} parent=1 // pred_region
      %69 = dma.done [#allocation3], 128
    $region33: #{qvectnet_forward.1} parent=1 // pred_fallthru
      _
    // Predicated region
    $region34: #{qvectnet_forward.1} parent=1 // pred_check
      _
    $region35: #{qvectnet_forward.1} parent=1 // pred_check_branch
      %71 = sbr.rel (0) target = $region37
    $region36: #{qvectnet_forward.1} parent=1 // pred_region
      %72 = dma.done [#allocation5], 512
    $region37: #{qvectnet_forward.1} parent=1 // pred_fallthru
      _
    // Predicated region
    $region38: #{qvectnet_forward.1} parent=1 // pred_check
      _
    $region39: #{qvectnet_forward.1} parent=1 // pred_check_branch
      %74 = sbr.rel (0) target = $region41
    $region40: #{qvectnet_forward.1} parent=1 // pred_region
      %75 = dma.done [#allocation5], 4096
    $region41: #{qvectnet_forward.1} parent=1 // pred_fallthru
      _
    // Predicated region
    $region42: #{qvectnet_forward.1} parent=1 // pred_check
      _
    $region43: #{qvectnet_forward.1} parent=1 // pred_check_branch
      %77 = sbr.rel (0) target = $region45
    $region44: #{qvectnet_forward.1} parent=1 // pred_region
      %78 = dma.done [#allocation8], 2048
    $region45: #{qvectnet_forward.1} parent=1 // pred_fallthru
      _
    %v80 = vld [vmem:[#allocation2] sm:$0xff]
    %v81 = vpack.c.bf16 %v80, %v80
    %v82 = vld [vmem:[#allocation4] sm:$0xff]
    %v83 = vld [vmem:[#allocation4 + $0x8] sm:$0xff]
    %v84 = vld [vmem:[#allocation4 + $0x10] sm:$0xff]
    %v85 = vld [vmem:[#allocation4 + $0x18] sm:$0xff]
    %v86 = vld [vmem:[%s2] sm:$0x3]
    %v88 = vlaneseq
    %v89 = vshrl.u32 %v88, 7
    %v90 = vsub.s32 0, %v89
    %v91 = vrot.slane %v86, %v90
    %v92 = vlaneseq
    %v93 = vshrl.u32 %v92, 7
    %v94 = vsub.s32 1, %v93
    %v95 = vrot.slane %v86, %v94
    %v102 = vunpack.c.l.b16 %v82
    %v103 = vunpack.c.h.b16 %v82
    %v104 = vunpack.c.l.b16 %v83
    %v105 = vunpack.c.h.b16 %v83
    %v106 = vunpack.c.l.b16 %v84
    %v107 = vunpack.c.h.b16 %v84
    %v108 = vunpack.c.l.b16 %v85
    %v109 = vunpack.c.h.b16 %v85
    %v110 = vpack.c.b16 %v104, %v102
    %v111 = vpack.c.b16 %v105, %v103
    %v112 = vpack.c.b16 %v108, %v106
    %v113 = vpack.c.b16 %v109, %v107
    %vm118 = vcmask 261120
    %v120 = vsel %vm118, %v81, 0
    %122 = vmatprep.subr.bf16.mxu0 0
    %123 = vmatpush1.bf16.msra.mxu0 0
    %124 = vmatprep.subr.bf16.mxu0 0
    %125 = vmatpush1.bf16.msra.mxu0 0
    %126 = vmatprep.subr.bf16.mxu0 0
    %127 = vmatpush1.bf16.msra.mxu0 0
    %128 = vmatprep.subr.bf16.mxu0 0
    %129 = vmatpush1.bf16.msra.mxu0 0
    %130 = vmatprep.subr.bf16.mxu0 0
    %131 = vmatpush1.bf16.msra.mxu0 0
    %132 = vmatprep.subr.bf16.mxu0 0
    %133 = vmatpush1.bf16.msra.mxu0 0
    %134 = vmatprep.subr.bf16.mxu0 %v113
    %135 = vmatpush1.bf16.msra.mxu0 %v112
    %136 = vmatprep.subr.bf16.mxu0 %v111
    %137 = vmatpush1.bf16.msra.mxu0 %v110
    %138 = vmatprep.subr.bf16.mxu0 0
    %139 = vmatpush2.bf16.msra.mxu0 0
    %140 = vmatprep.subr.bf16.mxu0 0
    %141 = vmatpush2.bf16.msra.mxu0 0
    %142 = vmatprep.subr.bf16.mxu0 0
    %143 = vmatpush2.bf16.msra.mxu0 0
    %144 = vmatprep.subr.bf16.mxu0 0
    %145 = vmatpush2.bf16.msra.mxu0 0
    %146 = vmatprep.subr.bf16.mxu0 0
    %147 = vmatpush2.bf16.msra.mxu0 0
    %148 = vmatprep.subr.bf16.mxu0 0
    %149 = vmatpush2.bf16.msra.mxu0 0
    %150 = vmatprep.subr.bf16.mxu0 0
    %151 = vmatpush2.bf16.msra.mxu0 0
    %152 = vmatprep.subr.bf16.mxu0 0
    %153 = vmatpush2.bf16.msra.mxu0 0
    %154 = vmatprep.mubr.bf16.mxu0 0
    %155 = vmatmul.mubr.bf16.gmra.mxu0 %v120
    %v156 = vpop.f32.mrf.mxu0
    %v157 = vadd.f32 %v91, %v156
    %v158 = vpop.f32.mrf.mxu0
    %v159 = vadd.f32 %v95, %v158
    %v160 = vpop.f32.mrf.mxu0
    %v161 = vpop.f32.mrf.mxu0
    %162 = vdwg.mxu0
    %v163 = vmax.f32 %v157, 0.0
    %v164 = vmax.f32 %v159, 0.0
    %v165 = vpack.c.bf16 %v163, %v163
    %v166 = vpack.c.bf16 %v164, %v164
    %v167 = vld [vmem:[#allocation6] sm:$0xff]
    %v168 = vld [vmem:[#allocation6 + $0x8] sm:$0xff]
    %v169 = vld [vmem:[#allocation6 + $0x10] sm:$0xff]
    %v170 = vld [vmem:[#allocation6 + $0x18] sm:$0xff]
    %v171 = vld [vmem:[#allocation6 + $0x20] sm:$0xff]
    %v172 = vld [vmem:[#allocation6 + $0x28] sm:$0xff]
    %v173 = vld [vmem:[#allocation6 + $0x30] sm:$0xff]
    %v174 = vld [vmem:[#allocation6 + $0x38] sm:$0xff]
    %v175 = vld [vmem:[#allocation6 + $0x40] sm:$0xff]
    %v176 = vld [vmem:[#allocation6 + $0x48] sm:$0xff]
    %v177 = vld [vmem:[#allocation6 + $0x50] sm:$0xff]
    %v178 = vld [vmem:[#allocation6 + $0x58] sm:$0xff]
    %v179 = vld [vmem:[#allocation6 + $0x60] sm:$0xff]
    %v180 = vld [vmem:[#allocation6 + $0x68] sm:$0xff]
    %v181 = vld [vmem:[#allocation6 + $0x70] sm:$0xff]
    %v182 = vld [vmem:[#allocation6 + $0x78] sm:$0xff]
    %v183 = vld [vmem:[#allocation6 + $0x80] sm:$0xff]
    %v184 = vld [vmem:[#allocation6 + $0x88] sm:$0xff]
    %v185 = vld [vmem:[#allocation6 + $0x90] sm:$0xff]
    %v186 = vld [vmem:[#allocation6 + $0x98] sm:$0xff]
    %v187 = vld [vmem:[#allocation6 + $0xa0] sm:$0xff]
    %v188 = vld [vmem:[#allocation6 + $0xa8] sm:$0xff]
    %v189 = vld [vmem:[#allocation6 + $0xb0] sm:$0xff]
    %v190 = vld [vmem:[#allocation6 + $0xb8] sm:$0xff]
    %v191 = vld [vmem:[#allocation6 + $0xc0] sm:$0xff]
    %v192 = vld [vmem:[#allocation6 + $0xc8] sm:$0xff]
    %v193 = vld [vmem:[#allocation6 + $0xd0] sm:$0xff]
    %v194 = vld [vmem:[#allocation6 + $0xd8] sm:$0xff]
    %v195 = vld [vmem:[#allocation6 + $0xe0] sm:$0xff]
    %v196 = vld [vmem:[#allocation6 + $0xe8] sm:$0xff]
    %v197 = vld [vmem:[#allocation6 + $0xf0] sm:$0xff]
    %v198 = vld [vmem:[#allocation6 + $0xf8] sm:$0xff]
    %v199 = vld [vmem:[%s4] sm:$0x3]
    %v201 = vlaneseq
    %v202 = vshrl.u32 %v201, 7
    %v203 = vsub.s32 0, %v202
    %v204 = vrot.slane %v199, %v203
    %v205 = vlaneseq
    %v206 = vshrl.u32 %v205, 7
    %v207 = vsub.s32 1, %v206
    %v208 = vrot.slane %v199, %v207
    %v243 = vunpack.c.l.b16 %v167
    %v244 = vunpack.c.h.b16 %v167
    %v245 = vunpack.c.l.b16 %v168
    %v246 = vunpack.c.h.b16 %v168
    %v247 = vunpack.c.l.b16 %v169
    %v248 = vunpack.c.h.b16 %v169
    %v249 = vunpack.c.l.b16 %v170
    %v250 = vunpack.c.h.b16 %v170
    %v251 = vunpack.c.l.b16 %v171
    %v252 = vunpack.c.h.b16 %v171
    %v253 = vunpack.c.l.b16 %v172
    %v254 = vunpack.c.h.b16 %v172
    %v255 = vunpack.c.l.b16 %v173
    %v256 = vunpack.c.h.b16 %v173
    %v257 = vunpack.c.l.b16 %v174
    %v258 = vunpack.c.h.b16 %v174
    %v259 = vunpack.c.l.b16 %v175
    %v260 = vunpack.c.h.b16 %v175
    %v261 = vunpack.c.l.b16 %v176
    %v262 = vunpack.c.h.b16 %v176
    %v263 = vunpack.c.l.b16 %v177
    %v264 = vunpack.c.h.b16 %v177
    %v265 = vunpack.c.l.b16 %v178
    %v266 = vunpack.c.h.b16 %v178
    %v267 = vunpack.c.l.b16 %v179
    %v268 = vunpack.c.h.b16 %v179
    %v269 = vunpack.c.l.b16 %v180
    %v270 = vunpack.c.h.b16 %v180
    %v271 = vunpack.c.l.b16 %v181
    %v272 = vunpack.c.h.b16 %v181
    %v273 = vunpack.c.l.b16 %v182
    %v274 = vunpack.c.h.b16 %v182
    %v275 = vunpack.c.l.b16 %v183
    %v276 = vunpack.c.h.b16 %v183
    %v277 = vunpack.c.l.b16 %v184
    %v278 = vunpack.c.h.b16 %v184
    %v279 = vunpack.c.l.b16 %v185
    %v280 = vunpack.c.h.b16 %v185
    %v281 = vunpack.c.l.b16 %v186
    %v282 = vunpack.c.h.b16 %v186
    %v283 = vunpack.c.l.b16 %v187
    %v284 = vunpack.c.h.b16 %v187
    %v285 = vunpack.c.l.b16 %v188
    %v286 = vunpack.c.h.b16 %v188
    %v287 = vunpack.c.l.b16 %v189
    %v288 = vunpack.c.h.b16 %v189
    %v289 = vunpack.c.l.b16 %v190
    %v290 = vunpack.c.h.b16 %v190
    %v291 = vunpack.c.l.b16 %v191
    %v292 = vunpack.c.h.b16 %v191
    %v293 = vunpack.c.l.b16 %v192
    %v294 = vunpack.c.h.b16 %v192
    %v295 = vunpack.c.l.b16 %v193
    %v296 = vunpack.c.h.b16 %v193
    %v297 = vunpack.c.l.b16 %v194
    %v298 = vunpack.c.h.b16 %v194
    %v299 = vunpack.c.l.b16 %v195
    %v300 = vunpack.c.h.b16 %v195
    %v301 = vunpack.c.l.b16 %v196
    %v302 = vunpack.c.h.b16 %v196
    %v303 = vunpack.c.l.b16 %v197
    %v304 = vunpack.c.h.b16 %v197
    %v305 = vunpack.c.l.b16 %v198
    %v306 = vunpack.c.h.b16 %v198
    %v307 = vpack.c.b16 %v245, %v243
    %v308 = vpack.c.b16 %v246, %v244
    %v309 = vpack.c.b16 %v249, %v247
    %v310 = vpack.c.b16 %v250, %v248
    %v311 = vpack.c.b16 %v253, %v251
    %v312 = vpack.c.b16 %v254, %v252
    %v313 = vpack.c.b16 %v257, %v255
    %v314 = vpack.c.b16 %v258, %v256
    %v315 = vpack.c.b16 %v261, %v259
    %v316 = vpack.c.b16 %v262, %v260
    %v317 = vpack.c.b16 %v265, %v263
    %v318 = vpack.c.b16 %v266, %v264
    %v319 = vpack.c.b16 %v269, %v267
    %v320 = vpack.c.b16 %v270, %v268
    %v321 = vpack.c.b16 %v273, %v271
    %v322 = vpack.c.b16 %v274, %v272
    %v323 = vpack.c.b16 %v277, %v275
    %v324 = vpack.c.b16 %v278, %v276
    %v325 = vpack.c.b16 %v281, %v279
    %v326 = vpack.c.b16 %v282, %v280
    %v327 = vpack.c.b16 %v285, %v283
    %v328 = vpack.c.b16 %v286, %v284
    %v329 = vpack.c.b16 %v289, %v287
    %v330 = vpack.c.b16 %v290, %v288
    %v331 = vpack.c.b16 %v293, %v291
    %v332 = vpack.c.b16 %v294, %v292
    %v333 = vpack.c.b16 %v297, %v295
    %v334 = vpack.c.b16 %v298, %v296
    %v335 = vpack.c.b16 %v301, %v299
    %v336 = vpack.c.b16 %v302, %v300
    %v337 = vpack.c.b16 %v305, %v303
    %v338 = vpack.c.b16 %v306, %v304
    %371 = vmatprep.subr.bf16.mxu0 %v322
    %372 = vmatpush1.bf16.msra.mxu0 %v321
    %373 = vmatprep.subr.bf16.mxu0 %v320
    %374 = vmatpush1.bf16.msra.mxu0 %v319
    %375 = vmatprep.subr.bf16.mxu0 %v318
    %376 = vmatpush1.bf16.msra.mxu0 %v317
    %377 = vmatprep.subr.bf16.mxu0 %v316
    %378 = vmatpush1.bf16.msra.mxu0 %v315
    %379 = vmatprep.subr.bf16.mxu0 %v314
    %380 = vmatpush1.bf16.msra.mxu0 %v313
    %381 = vmatprep.subr.bf16.mxu0 %v312
    %382 = vmatpush1.bf16.msra.mxu0 %v311
    %383 = vmatprep.subr.bf16.mxu0 %v310
    %384 = vmatpush1.bf16.msra.mxu0 %v309
    %385 = vmatprep.subr.bf16.mxu0 %v308
    %386 = vmatpush1.bf16.msra.mxu0 %v307
    %387 = vmatprep.subr.bf16.mxu0 %v338
    %388 = vmatpush2.bf16.msra.mxu0 %v337
    %389 = vmatprep.subr.bf16.mxu0 %v336
    %390 = vmatpush2.bf16.msra.mxu0 %v335
    %391 = vmatprep.subr.bf16.mxu0 %v334
    %392 = vmatpush2.bf16.msra.mxu0 %v333
    %393 = vmatprep.subr.bf16.mxu0 %v332
    %394 = vmatpush2.bf16.msra.mxu0 %v331
    %395 = vmatprep.subr.bf16.mxu0 %v330
    %396 = vmatpush2.bf16.msra.mxu0 %v329
    %397 = vmatprep.subr.bf16.mxu0 %v328
    %398 = vmatpush2.bf16.msra.mxu0 %v327
    %399 = vmatprep.subr.bf16.mxu0 %v326
    %400 = vmatpush2.bf16.msra.mxu0 %v325
    %401 = vmatprep.subr.bf16.mxu0 %v324
    %402 = vmatpush2.bf16.msra.mxu0 %v323
    %403 = vmatprep.mubr.bf16.mxu0 %v166
    %404 = vmatmul.mubr.bf16.gmra.mxu0 %v165
    %v405 = vpop.f32.mrf.mxu0
    %v406 = vadd.f32 %v204, %v405
    %v407 = vpop.f32.mrf.mxu0
    %v408 = vadd.f32 %v208, %v407
    %v409 = vpop.f32.mrf.mxu0
    %v410 = vpop.f32.mrf.mxu0
    %411 = vdwg.mxu0
    %v412 = vmax.f32 %v406, 0.0
    %v413 = vmax.f32 %v408, 0.0
    %v414 = vpack.c.bf16 %v412, %v412
    %v415 = vpack.c.bf16 %v413, %v413
    %v416 = vld [vmem:[#allocation7] sm:$0xf]
    %v417 = vld [vmem:[#allocation7 + $0x4] sm:$0xf]
    %v418 = vld [vmem:[#allocation7 + $0x8] sm:$0xf]
    %v419 = vld [vmem:[#allocation7 + $0xc] sm:$0xf]
    %v420 = vld [vmem:[#allocation7 + $0x10] sm:$0xf]
    %v421 = vld [vmem:[#allocation7 + $0x14] sm:$0xf]
    %v422 = vld [vmem:[#allocation7 + $0x18] sm:$0xf]
    %v423 = vld [vmem:[#allocation7 + $0x1c] sm:$0xf]
    %v424 = vld [vmem:[#allocation7 + $0x20] sm:$0xf]
    %v425 = vld [vmem:[#allocation7 + $0x24] sm:$0xf]
    %v426 = vld [vmem:[#allocation7 + $0x28] sm:$0xf]
    %v427 = vld [vmem:[#allocation7 + $0x2c] sm:$0xf]
    %v428 = vld [vmem:[#allocation7 + $0x30] sm:$0xf]
    %v429 = vld [vmem:[#allocation7 + $0x34] sm:$0xf]
    %v430 = vld [vmem:[#allocation7 + $0x38] sm:$0xf]
    %v431 = vld [vmem:[#allocation7 + $0x3c] sm:$0xf]
    %v432 = vld [vmem:[#allocation7 + $0x40] sm:$0xf]
    %v433 = vld [vmem:[#allocation7 + $0x44] sm:$0xf]
    %v434 = vld [vmem:[#allocation7 + $0x48] sm:$0xf]
    %v435 = vld [vmem:[#allocation7 + $0x4c] sm:$0xf]
    %v436 = vld [vmem:[#allocation7 + $0x50] sm:$0xf]
    %v437 = vld [vmem:[#allocation7 + $0x54] sm:$0xf]
    %v438 = vld [vmem:[#allocation7 + $0x58] sm:$0xf]
    %v439 = vld [vmem:[#allocation7 + $0x5c] sm:$0xf]
    %v440 = vld [vmem:[#allocation7 + $0x60] sm:$0xf]
    %v441 = vld [vmem:[#allocation7 + $0x64] sm:$0xf]
    %v442 = vld [vmem:[#allocation7 + $0x68] sm:$0xf]
    %v443 = vld [vmem:[#allocation7 + $0x6c] sm:$0xf]
    %v444 = vld [vmem:[#allocation7 + $0x70] sm:$0xf]
    %v445 = vld [vmem:[#allocation7 + $0x74] sm:$0xf]
    %v446 = vld [vmem:[#allocation7 + $0x78] sm:$0xf]
    %v447 = vld [vmem:[#allocation7 + $0x7c] sm:$0xf]
    %v448 = vld [vmem:[%s6] sm:$0x1]
    %v450 = vlaneseq
    %v451 = vshrl.u32 %v450, 7
    %v452 = vsub.s32 0, %v451
    %v453 = vrot.slane %v448, %v452
    %v487 = vunpack.c.l.b16 %v416
    %v488 = vunpack.c.l.b16 %v417
    %v489 = vunpack.c.l.b16 %v418
    %v490 = vunpack.c.l.b16 %v419
    %v491 = vunpack.c.l.b16 %v420
    %v492 = vunpack.c.l.b16 %v421
    %v493 = vunpack.c.l.b16 %v422
    %v494 = vunpack.c.l.b16 %v423
    %v495 = vunpack.c.l.b16 %v424
    %v496 = vunpack.c.l.b16 %v425
    %v497 = vunpack.c.l.b16 %v426
    %v498 = vunpack.c.l.b16 %v427
    %v499 = vunpack.c.l.b16 %v428
    %v500 = vunpack.c.l.b16 %v429
    %v501 = vunpack.c.l.b16 %v430
    %v502 = vunpack.c.l.b16 %v431
    %v503 = vunpack.c.l.b16 %v432
    %v504 = vunpack.c.l.b16 %v433
    %v505 = vunpack.c.l.b16 %v434
    %v506 = vunpack.c.l.b16 %v435
    %v507 = vunpack.c.l.b16 %v436
    %v508 = vunpack.c.l.b16 %v437
    %v509 = vunpack.c.l.b16 %v438
    %v510 = vunpack.c.l.b16 %v439
    %v511 = vunpack.c.l.b16 %v440
    %v512 = vunpack.c.l.b16 %v441
    %v513 = vunpack.c.l.b16 %v442
    %v514 = vunpack.c.l.b16 %v443
    %v515 = vunpack.c.l.b16 %v444
    %v516 = vunpack.c.l.b16 %v445
    %v517 = vunpack.c.l.b16 %v446
    %v518 = vunpack.c.l.b16 %v447
    %v519 = vpack.c.b16 %v488, %v487
    %v520 = vpack.c.b16 %v490, %v489
    %v521 = vpack.c.b16 %v492, %v491
    %v522 = vpack.c.b16 %v494, %v493
    %v523 = vpack.c.b16 %v496, %v495
    %v524 = vpack.c.b16 %v498, %v497
    %v525 = vpack.c.b16 %v500, %v499
    %v526 = vpack.c.b16 %v502, %v501
    %v527 = vpack.c.b16 %v504, %v503
    %v528 = vpack.c.b16 %v506, %v505
    %v529 = vpack.c.b16 %v508, %v507
    %v530 = vpack.c.b16 %v510, %v509
    %v531 = vpack.c.b16 %v512, %v511
    %v532 = vpack.c.b16 %v514, %v513
    %v533 = vpack.c.b16 %v516, %v515
    %v534 = vpack.c.b16 %v518, %v517
    %551 = vmatprep.subr.bf16.mxu0 0
    %552 = vmatpush1.bf16.msra.mxu0 %v526
    %553 = vmatprep.subr.bf16.mxu0 0
    %554 = vmatpush1.bf16.msra.mxu0 %v525
    %555 = vmatprep.subr.bf16.mxu0 0
    %556 = vmatpush1.bf16.msra.mxu0 %v524
    %557 = vmatprep.subr.bf16.mxu0 0
    %558 = vmatpush1.bf16.msra.mxu0 %v523
    %559 = vmatprep.subr.bf16.mxu0 0
    %560 = vmatpush1.bf16.msra.mxu0 %v522
    %561 = vmatprep.subr.bf16.mxu0 0
    %562 = vmatpush1.bf16.msra.mxu0 %v521
    %563 = vmatprep.subr.bf16.mxu0 0
    %564 = vmatpush1.bf16.msra.mxu0 %v520
    %565 = vmatprep.subr.bf16.mxu0 0
    %566 = vmatpush1.bf16.msra.mxu0 %v519
    %567 = vmatprep.subr.bf16.mxu0 0
    %568 = vmatpush2.bf16.msra.mxu0 %v534
    %569 = vmatprep.subr.bf16.mxu0 0
    %570 = vmatpush2.bf16.msra.mxu0 %v533
    %571 = vmatprep.subr.bf16.mxu0 0
    %572 = vmatpush2.bf16.msra.mxu0 %v532
    %573 = vmatprep.subr.bf16.mxu0 0
    %574 = vmatpush2.bf16.msra.mxu0 %v531
    %575 = vmatprep.subr.bf16.mxu0 0
    %576 = vmatpush2.bf16.msra.mxu0 %v530
    %577 = vmatprep.subr.bf16.mxu0 0
    %578 = vmatpush2.bf16.msra.mxu0 %v529
    %579 = vmatprep.subr.bf16.mxu0 0
    %580 = vmatpush2.bf16.msra.mxu0 %v528
    %581 = vmatprep.subr.bf16.mxu0 0
    %582 = vmatpush2.bf16.msra.mxu0 %v527
    %583 = vmatprep.mubr.bf16.mxu0 %v415
    %584 = vmatmul.mubr.bf16.gmra.mxu0 %v414
    %v585 = vpop.f32.mrf.mxu0
    %v586 = vadd.f32 %v453, %v585
    %v587 = vpop.f32.mrf.mxu0
    %v588 = vpop.f32.mrf.mxu0
    %v589 = vpop.f32.mrf.mxu0
    %590 = vdwg.mxu0
    %vm591 = vcmask 31744
    %592 = vst.msk [vmem:[%s7] sm:$0xff] %vm591, %v586
    // Predicated region
    $region46: #{qvectnet_forward.1} parent=1 // pred_check
      _
    $region47: #{qvectnet_forward.1} parent=1 // pred_check_branch
      %594 = sbr.rel (0) target = $region49
    $region48: #{qvectnet_forward.1} parent=1 // pred_region
      _
    $region49: #{qvectnet_forward.1} parent=1 // pred_fallthru
      _
    // Predicated region
    $region50: #{qvectnet_forward.1} parent=1 // pred_check
      _
    $region51: #{qvectnet_forward.1} parent=1 // pred_check_branch
      %596 = sbr.rel (0) target = $region53
    $region52: #{qvectnet_forward.1} parent=1 // pred_region
      _
    $region53: #{qvectnet_forward.1} parent=1 // pred_fallthru
      _
    %597 = vsyncpa [#allocation3], 1
    %598 = vsyncpa [#allocation5], 1
    %599 = vsyncpa [#allocation8], 1

</llo_original>
